<compile_context>
chip_gen: v5e
topology: v5e:2x2
jax: 0.10.0
libtpu: 0.0.40
codegen_flags: <defaults>
</compile_context>

<pallas_src>
import functools

import jax
import jax.numpy as jnp
from jax.experimental import pallas as pl
from jax.experimental.pallas import tpu as pltpu


def _round_up(x, m):
    return ((x + m - 1) // m) * m


def _camera_se_kernel(cam_ref, feat_ref, w1_ref, b1_ref, w2_ref, b2_ref,
                      w3_ref, b3_ref, out_ref, *, cam_dim, vpu_first_layer):
    # cam_ref : (Cc, Tn) f32   (BatchNorm affine already folded into w1/b1)
    # feat_ref: (Hc, Tn) f32
    # w1: (Hc, Cc) f32   b1,b2,b3: (Hc, 1) f32   w2,w3: (Hc, Hc) f32|bf16
    gate_dtype = w2_ref.dtype

    # ---- layer 1: cam_dim -> hidden (+ folded BatchNorm) ----
    if vpu_first_layer:
        # K == cam_dim is tiny (4): a handful of broadcast-FMAs on the VPU is
        # cheaper than pushing an MXU matmul with a nearly-empty K dimension.
        h = w1_ref[:, 0:1] * cam_ref[0:1, :]
        for c in range(1, cam_dim):
            h = h + w1_ref[:, c:c + 1] * cam_ref[c:c + 1, :]
        h = h + b1_ref[...]
    else:
        h = jnp.dot(w1_ref[...], cam_ref[...],
                    preferred_element_type=jnp.float32) + b1_ref[...]
    h = jnp.maximum(h, 0.0)

    # ---- layer 2: hidden -> hidden (MXU) ----
    h = jnp.dot(w2_ref[...], h.astype(gate_dtype),
                preferred_element_type=jnp.float32) + b2_ref[...]
    h = jnp.maximum(h, 0.0)

    # ---- layer 3: hidden -> hidden (MXU) ----
    h = jnp.dot(w3_ref[...], h.astype(gate_dtype),
                preferred_element_type=jnp.float32) + b3_ref[...]

    # ---- sigmoid gate applied to feat; lane-dense store ----
    out_ref[...] = feat_ref[...] * jax.nn.sigmoid(h)


def camera_se_forward(feat, cam_info, params, *, tile_n=512, bf16_gate=False):
    """feat: (B, hidden, N) f32,  cam_info: (B, cam_dim, N) f32."""
    B, Hc, N = feat.shape
    Bc, Cc, Nc = cam_info.shape
    assert (Bc, Nc) == (B, N)
    assert tile_n % 128 == 0, "tile_n must be a multiple of 128 (lane width)"

    # --- glue: training-mode BatchNorm1d batch stats folded into conv #1 ---
    # TODO(synk): running-mean/var updates and eval-mode (running-stats)
    # normalization are not implemented; training-mode forward only.
    mean = cam_info.mean(axis=(0, 2))                      # (cam_dim,)
    var = cam_info.var(axis=(0, 2))                        # biased, like PyTorch
    scale = params["bn_gamma"] / jnp.sqrt(var + 1e-5)      # (cam_dim,)
    shift = params["bn_beta"] - mean * scale               # (cam_dim,)

    w1 = params["w1"][:, :, 0]                             # (Hc, Cc)
    w2 = params["w2"][:, :, 0]                             # (Hc, Hc)
    w3 = params["w3"][:, :, 0]                             # (Hc, Hc)
    w1f = w1 * scale[None, :]                              # BN scale folded in
    b1f = (w1 @ shift + params["b1"])[:, None]             # (Hc, 1), BN shift folded
    b2 = params["b2"][:, None]
    b3 = params["b3"][:, None]

    gate_dtype = jnp.bfloat16 if bf16_gate else jnp.float32
    w2 = w2.astype(gate_dtype)
    w3 = w3.astype(gate_dtype)

    # --- native (B, C, N) layout: channels in sublanes, tokens in lanes ---
    tn = min(tile_n, _round_up(N, 128))                    # effective lane tile
    N_pad = _round_up(N, tn)
    if N_pad != N:                                         # remainder handling
        pad = [(0, 0), (0, 0), (0, N_pad - N)]
        feat_p = jnp.pad(feat, pad)
        cam_p = jnp.pad(cam_info, pad)
    else:
        feat_p, cam_p = feat, cam_info

    grid = (B, N_pad // tn)
    full = lambda b, n: (0, 0)

    kernel = functools.partial(_camera_se_kernel, cam_dim=Cc,
                               vpu_first_layer=Cc <= 8)

    # scoped-VMEM budget: resident weights + double-buffered streaming blocks
    weight_bytes = (w1f.size + b1f.size + b2.size + b3.size) * 4 \
        + (w2.size + w3.size) * w2.dtype.itemsize
    stream_bytes = 4 * tn * (Cc + 2 * Hc)                  # cam + feat + out / step
    vmem_limit = int(min(max(2 * (weight_bytes + 2 * stream_bytes) + (4 << 20),
                             16 << 20), 32 << 20))         # <= ~32 MiB (v7x-safe)

    out = pl.pallas_call(
        kernel,
        out_shape=jax.ShapeDtypeStruct((B, Hc, N_pad), feat.dtype),
        grid_spec=pltpu.PrefetchScalarGridSpec(
            num_scalar_prefetch=0,
            grid=grid,
            in_specs=[
                pl.BlockSpec((None, Cc, tn), lambda b, n: (b, 0, n)),   # cam tokens
                pl.BlockSpec((None, Hc, tn), lambda b, n: (b, 0, n)),   # feat tokens
                pl.BlockSpec((Hc, Cc), full),                           # w1 (BN folded)
                pl.BlockSpec((Hc, 1), full),                            # b1 (BN folded)
                pl.BlockSpec((Hc, Hc), full),                           # w2
                pl.BlockSpec((Hc, 1), full),                            # b2
                pl.BlockSpec((Hc, Hc), full),                           # w3
                pl.BlockSpec((Hc, 1), full),                            # b3
            ],
            out_specs=pl.BlockSpec((None, Hc, tn), lambda b, n: (b, 0, n)),
        ),
        compiler_params=pltpu.CompilerParams(
            dimension_semantics=("parallel", "parallel"),
            vmem_limit_bytes=vmem_limit),
    )(cam_p, feat_p, w1f, b1f, w2, b2, w3, b3)

    return out[:, :, :N] if N_pad != N else out


def camera_se_reference(feat, cam_info, params):
    """Pure-JAX reference mirroring the PyTorch module (training-mode BN)."""
    mean = cam_info.mean(axis=(0, 2), keepdims=True)
    var = cam_info.var(axis=(0, 2), keepdims=True)
    x = (cam_info - mean) / jnp.sqrt(var + 1e-5)
    x = x * params["bn_gamma"][None, :, None] + params["bn_beta"][None, :, None]

    def conv1x1(x, w, b):  # x: (B, Cin, N), w: (Cout, Cin, 1)
        return jnp.einsum("oc,bcn->bon", w[:, :, 0], x) + b[None, :, None]

    h = jax.nn.relu(conv1x1(x, params["w1"], params["b1"]))
    h = jax.nn.relu(conv1x1(h, params["w2"], params["b2"]))
    h = conv1x1(h, params["w3"], params["b3"])
    return feat * jax.nn.sigmoid(h)


def init_params(key, cam_dim, hidden):
    ks = jax.random.split(key, 8)
    return {
        "bn_gamma": 1.0 + 0.1 * jax.random.normal(ks[0], (cam_dim,), jnp.float32),
        "bn_beta": 0.1 * jax.random.normal(ks[1], (cam_dim,), jnp.float32),
        "w1": 0.2 * jax.random.normal(ks[2], (hidden, cam_dim, 1), jnp.float32),
        "b1": 0.1 * jax.random.normal(ks[3], (hidden,), jnp.float32),
        "w2": 0.2 * jax.random.normal(ks[4], (hidden, hidden, 1), jnp.float32),
        "b2": 0.1 * jax.random.normal(ks[5], (hidden,), jnp.float32),
        "w3": 0.2 * jax.random.normal(ks[6], (hidden, hidden, 1), jnp.float32),
        "b3": 0.1 * jax.random.normal(ks[7], (hidden,), jnp.float32),
    }


if __name__ == "__main__":
    B, cam_dim, hidden, N = 2, 4, 32, 384   # N not a tile multiple -> tests padding

    key = jax.random.PRNGKey(0)
    kf, kc, kp = jax.random.split(key, 3)
    feat = jax.random.normal(kf, (B, hidden, N), jnp.float32)
    cam_info = jax.random.normal(kc, (B, cam_dim, N), jnp.float32)
    params = init_params(kp, cam_dim, hidden)

    ref = camera_se_reference(feat, cam_info, params)

    # f32 gate path: tile_n=256 exercises the (B, N-tiles) grid + padded tail.
    out = camera_se_forward(feat, cam_info, params, tile_n=256)
    out = jax.block_until_ready(out)
    assert out.shape == (B, hidden, N)
    assert jnp.allclose(out, ref, atol=1e-5, rtol=1e-5), "f32 mismatch vs reference"

    # bf16 gate-matmul path (v6e/v7x MXU-native); f32 accumulation + f32 gating,
    # so the error through sigmoid is small but not bit-exact.
    out_bf16 = camera_se_forward(feat, cam_info, params, tile_n=512, bf16_gate=True)
    out_bf16 = jax.block_until_ready(out_bf16)
    assert jnp.allclose(out_bf16, ref, atol=7.5e-2, rtol=5e-2), "bf16 mismatch vs reference"

    print("KERNEL_OK")
</pallas_src>

<mosaic_0001>
module attributes {stable_mosaic.version = 11 : i64} {
  func.func @_camera_se_kernel(%arg0: i32, %arg1: i32, %arg2: memref<1x4x256xf32, #tpu.memory_space<vmem>>, %arg3: memref<1x32x256xf32, #tpu.memory_space<vmem>>, %arg4: memref<32x4xf32, #tpu.memory_space<vmem>>, %arg5: memref<32x1xf32, #tpu.memory_space<vmem>>, %arg6: memref<32x32xf32, #tpu.memory_space<vmem>>, %arg7: memref<32x1xf32, #tpu.memory_space<vmem>>, %arg8: memref<32x32xf32, #tpu.memory_space<vmem>>, %arg9: memref<32x1xf32, #tpu.memory_space<vmem>>, %arg10: memref<1x32x256xf32, #tpu.memory_space<vmem>>) attributes {dimension_semantics = [#tpu.dimension_semantics<parallel>, #tpu.dimension_semantics<parallel>], iteration_bounds = array<i64: 2, 2>, scalar_prefetch = 0 : i64, scratch_operands = 0 : i64, tpu.core_type = #tpu.core_type<tc>, window_params = [{transform_indices = @transform_0, window_bounds = array<i64: 1, 4, 256>}, {transform_indices = @transform_1, window_bounds = array<i64: 1, 32, 256>}, {pipeline_mode = #tpu.pipeline_mode<synchronous>, transform_indices = @transform_2, window_bounds = array<i64: 32, 4>}, {pipeline_mode = #tpu.pipeline_mode<synchronous>, transform_indices = @transform_3, window_bounds = array<i64: 32, 1>}, {pipeline_mode = #tpu.pipeline_mode<synchronous>, transform_indices = @transform_4, window_bounds = array<i64: 32, 32>}, {pipeline_mode = #tpu.pipeline_mode<synchronous>, transform_indices = @transform_5, window_bounds = array<i64: 32, 1>}, {pipeline_mode = #tpu.pipeline_mode<synchronous>, transform_indices = @transform_6, window_bounds = array<i64: 32, 32>}, {pipeline_mode = #tpu.pipeline_mode<synchronous>, transform_indices = @transform_7, window_bounds = array<i64: 32, 1>}, {transform_indices = @transform_8, window_bounds = array<i64: 1, 32, 256>}]} {
    %c0 = arith.constant 0 : index
    %c0_0 = arith.constant 0 : index
    %0 = vector.load %arg4[%c0, %c0_0] : memref<32x4xf32, #tpu.memory_space<vmem>>, vector<32x1xf32>
    %c0_1 = arith.constant 0 : index
    %c0_2 = arith.constant 0 : index
    %c0_3 = arith.constant 0 : index
    %1 = vector.load %arg2[%c0_1, %c0_2, %c0_3] : memref<1x4x256xf32, #tpu.memory_space<vmem>>, vector<1x1x256xf32>
    %2 = vector.shape_cast %1 : vector<1x1x256xf32> to vector<1x256xf32>
    %3 = vector.broadcast %0 : vector<32x1xf32> to vector<32x256xf32>
    %4 = vector.broadcast %2 : vector<1x256xf32> to vector<32x256xf32>
    %5 = arith.mulf %3, %4 : vector<32x256xf32>
    %c0_4 = arith.constant 0 : index
    %c1 = arith.constant 1 : index
    %6 = vector.load %arg4[%c0_4, %c1] : memref<32x4xf32, #tpu.memory_space<vmem>>, vector<32x1xf32>
    %c0_5 = arith.constant 0 : index
    %c1_6 = arith.constant 1 : index
    %c0_7 = arith.constant 0 : index
    %7 = vector.load %arg2[%c0_5, %c1_6, %c0_7] : memref<1x4x256xf32, #tpu.memory_space<vmem>>, vector<1x1x256xf32>
    %8 = vector.shape_cast %7 : vector<1x1x256xf32> to vector<1x256xf32>
    %9 = vector.broadcast %6 : vector<32x1xf32> to vector<32x256xf32>
    %10 = vector.broadcast %8 : vector<1x256xf32> to vector<32x256xf32>
    %11 = arith.mulf %9, %10 : vector<32x256xf32>
    %12 = arith.addf %5, %11 : vector<32x256xf32>
    %c0_8 = arith.constant 0 : index
    %c2 = arith.constant 2 : index
    %13 = vector.load %arg4[%c0_8, %c2] : memref<32x4xf32, #tpu.memory_space<vmem>>, vector<32x1xf32>
    %c0_9 = arith.constant 0 : index
    %c2_10 = arith.constant 2 : index
    %c0_11 = arith.constant 0 : index
    %14 = vector.load %arg2[%c0_9, %c2_10, %c0_11] : memref<1x4x256xf32, #tpu.memory_space<vmem>>, vector<1x1x256xf32>
    %15 = vector.shape_cast %14 : vector<1x1x256xf32> to vector<1x256xf32>
    %16 = vector.broadcast %13 : vector<32x1xf32> to vector<32x256xf32>
    %17 = vector.broadcast %15 : vector<1x256xf32> to vector<32x256xf32>
    %18 = arith.mulf %16, %17 : vector<32x256xf32>
    %19 = arith.addf %12, %18 : vector<32x256xf32>
    %c0_12 = arith.constant 0 : index
    %c3 = arith.constant 3 : index
    %20 = vector.load %arg4[%c0_12, %c3] : memref<32x4xf32, #tpu.memory_space<vmem>>, vector<32x1xf32>
    %c0_13 = arith.constant 0 : index
    %c3_14 = arith.constant 3 : index
    %c0_15 = arith.constant 0 : index
    %21 = vector.load %arg2[%c0_13, %c3_14, %c0_15] : memref<1x4x256xf32, #tpu.memory_space<vmem>>, vector<1x1x256xf32>
    %22 = vector.shape_cast %21 : vector<1x1x256xf32> to vector<1x256xf32>
    %23 = vector.broadcast %20 : vector<32x1xf32> to vector<32x256xf32>
    %24 = vector.broadcast %22 : vector<1x256xf32> to vector<32x256xf32>
    %25 = arith.mulf %23, %24 : vector<32x256xf32>
    %26 = arith.addf %19, %25 : vector<32x256xf32>
    %c0_16 = arith.constant 0 : index
    %c0_17 = arith.constant 0 : index
    %27 = vector.load %arg5[%c0_16, %c0_17] : memref<32x1xf32, #tpu.memory_space<vmem>>, vector<32x1xf32>
    %28 = vector.broadcast %27 : vector<32x1xf32> to vector<32x256xf32>
    %29 = arith.addf %26, %28 : vector<32x256xf32>
    %cst = arith.constant 0.000000e+00 : f32
    %30 = vector.broadcast %cst : f32 to vector<32x256xf32>
    %31 = arith.maximumf %29, %30 : vector<32x256xf32>
    %c0_18 = arith.constant 0 : index
    %c0_19 = arith.constant 0 : index
    %32 = vector.load %arg6[%c0_18, %c0_19] : memref<32x32xf32, #tpu.memory_space<vmem>>, vector<32x32xf32>
    %cst_20 = arith.constant dense<0.000000e+00> : vector<32x256xf32>
    %33 = tpu.matmul %32, %31, %cst_20 {dimension_numbers = #tpu.dot_dimension_numbers<[1], [0], [0], [1], [0, 0, 1, 1], [], []>} : vector<32x32xf32>, vector<32x256xf32>, vector<32x256xf32> -> vector<32x256xf32>
    %c0_21 = arith.constant 0 : index
    %c0_22 = arith.constant 0 : index
    %34 = vector.load %arg7[%c0_21, %c0_22] : memref<32x1xf32, #tpu.memory_space<vmem>>, vector<32x1xf32>
    %35 = vector.broadcast %34 : vector<32x1xf32> to vector<32x256xf32>
    %36 = arith.addf %33, %35 : vector<32x256xf32>
    %cst_23 = arith.constant 0.000000e+00 : f32
    %37 = vector.broadcast %cst_23 : f32 to vector<32x256xf32>
    %38 = arith.maximumf %36, %37 : vector<32x256xf32>
    %c0_24 = arith.constant 0 : index
    %c0_25 = arith.constant 0 : index
    %39 = vector.load %arg8[%c0_24, %c0_25] : memref<32x32xf32, #tpu.memory_space<vmem>>, vector<32x32xf32>
    %cst_26 = arith.constant dense<0.000000e+00> : vector<32x256xf32>
    %40 = tpu.matmul %39, %38, %cst_26 {dimension_numbers = #tpu.dot_dimension_numbers<[1], [0], [0], [1], [0, 0, 1, 1], [], []>} : vector<32x32xf32>, vector<32x256xf32>, vector<32x256xf32> -> vector<32x256xf32>
    %c0_27 = arith.constant 0 : index
    %c0_28 = arith.constant 0 : index
    %41 = vector.load %arg9[%c0_27, %c0_28] : memref<32x1xf32, #tpu.memory_space<vmem>>, vector<32x1xf32>
    %42 = vector.broadcast %41 : vector<32x1xf32> to vector<32x256xf32>
    %43 = arith.addf %40, %42 : vector<32x256xf32>
    %c0_29 = arith.constant 0 : index
    %c0_30 = arith.constant 0 : index
    %c0_31 = arith.constant 0 : index
    %44 = vector.load %arg3[%c0_29, %c0_30, %c0_31] : memref<1x32x256xf32, #tpu.memory_space<vmem>>, vector<1x32x256xf32>
    %45 = vector.shape_cast %44 : vector<1x32x256xf32> to vector<32x256xf32>
    %46 = arith.negf %43 : vector<32x256xf32>
    %47 = math.exp %46 : vector<32x256xf32>
    %cst_32 = arith.constant 1.000000e+00 : f32
    %48 = vector.broadcast %cst_32 : f32 to vector<32x256xf32>
    %49 = arith.addf %48, %47 : vector<32x256xf32>
    %50 = arith.divf %48, %49 : vector<32x256xf32>
    %51 = arith.mulf %45, %50 : vector<32x256xf32>
    %c0_33 = arith.constant 0 : index
    %c0_34 = arith.constant 0 : index
    %c0_35 = arith.constant 0 : index
    %52 = vector.load %arg10[%c0_33, %c0_34, %c0_35] : memref<1x32x256xf32, #tpu.memory_space<vmem>>, vector<1x32x256xf32>
    %53 = vector.shape_cast %52 : vector<1x32x256xf32> to vector<32x256xf32>
    %54 = vector.shape_cast %51 : vector<32x256xf32> to vector<1x32x256xf32>
    tpu.vector_store %arg10[%c0_33, %c0_34, %c0_35], %54 {strides = array<i32>} : memref<1x32x256xf32, #tpu.memory_space<vmem>>, vector<1x32x256xf32>,
    return
  }
  func.func @transform_0(%arg0: i32, %arg1: i32) -> (i32, i32, i32) {
    %c0_i32 = arith.constant 0 : i32
    %c0_i32_0 = arith.constant 0 : i32
    return %arg0, %c0_i32, %arg1 : i32, i32, i32
  }
  func.func @transform_1(%arg0: i32, %arg1: i32) -> (i32, i32, i32) {
    %c0_i32 = arith.constant 0 : i32
    %c0_i32_0 = arith.constant 0 : i32
    return %arg0, %c0_i32, %arg1 : i32, i32, i32
  }
  func.func @transform_2(%arg0: i32, %arg1: i32) -> (i32, i32) {
    %c0_i32 = arith.constant 0 : i32
    %c0_i32_0 = arith.constant 0 : i32
    %c0_i32_1 = arith.constant 0 : i32
    return %c0_i32, %c0_i32_0 : i32, i32
  }
  func.func @transform_3(%arg0: i32, %arg1: i32) -> (i32, i32) {
    %c0_i32 = arith.constant 0 : i32
    %c0_i32_0 = arith.constant 0 : i32
    %c0_i32_1 = arith.constant 0 : i32
    return %c0_i32, %c0_i32_0 : i32, i32
  }
  func.func @transform_4(%arg0: i32, %arg1: i32) -> (i32, i32) {
    %c0_i32 = arith.constant 0 : i32
    %c0_i32_0 = arith.constant 0 : i32
    %c0_i32_1 = arith.constant 0 : i32
    return %c0_i32, %c0_i32_0 : i32, i32
  }
  func.func @transform_5(%arg0: i32, %arg1: i32) -> (i32, i32) {
    %c0_i32 = arith.constant 0 : i32
    %c0_i32_0 = arith.constant 0 : i32
    %c0_i32_1 = arith.constant 0 : i32
    return %c0_i32, %c0_i32_0 : i32, i32
  }
  func.func @transform_6(%arg0: i32, %arg1: i32) -> (i32, i32) {
    %c0_i32 = arith.constant 0 : i32
    %c0_i32_0 = arith.constant 0 : i32
    %c0_i32_1 = arith.constant 0 : i32
    return %c0_i32, %c0_i32_0 : i32, i32
  }
  func.func @transform_7(%arg0: i32, %arg1: i32) -> (i32, i32) {
    %c0_i32 = arith.constant 0 : i32
    %c0_i32_0 = arith.constant 0 : i32
    %c0_i32_1 = arith.constant 0 : i32
    return %c0_i32, %c0_i32_0 : i32, i32
  }
  func.func @transform_8(%arg0: i32, %arg1: i32) -> (i32, i32, i32) {
    %c0_i32 = arith.constant 0 : i32
    %c0_i32_0 = arith.constant 0 : i32
    return %arg0, %c0_i32, %arg1 : i32, i32, i32
  }
}

</mosaic_0001>

<llo_original>
// kernel: tpu_custom_call.1
$region0: #{tpu_custom_call.1}
  #allocation0 [shape = 'u32[]', space=smem, size = 0x4, offset = 0x4, fixed_abs, tag = 'smem constant byte address 0x4 - core index']
  #allocation1 [shape = 'u32[72,128]{1,0:T(1,128)}', space=vmem, size = 0x9000, scoped, tag = 'internal scratch']
  %s0 = inlined_call_operand.vmem [shape: f32[2,4,512], index: 0, kind: input, shape index: {}]
  %s1 = inlined_call_operand.hbm [shape: f32[2,32,512], index: 1, kind: input, shape index: {}]
  %s2 = inlined_call_operand.vmem [shape: f32[32,4], index: 2, kind: input, shape index: {}]
  %s3 = inlined_call_operand.vmem [shape: f32[32,1], index: 3, kind: input, shape index: {}]
  %s4 = inlined_call_operand.vmem [shape: f32[32,32], index: 4, kind: input, shape index: {}]
  %s5 = inlined_call_operand.vmem [shape: f32[32,1], index: 5, kind: input, shape index: {}]
  %s6 = inlined_call_operand.vmem [shape: f32[32,32], index: 6, kind: input, shape index: {}]
  %s7 = inlined_call_operand.vmem [shape: f32[32,1], index: 7, kind: input, shape index: {}]
  %s8 = inlined_call_operand.hbm [shape: f32[2,32,512], index: 8, kind: output, shape index: {}]
  %s9 = sld [smem:[#allocation0]]
  $region69: #{tpu_custom_call.1} parent=0
    _
  %s11 = ssub.s32 1, %s9
  %s12 = scalar_select 0, %s11, %s9
  $region1: #{tpu_custom_call.1} parent=0
    #allocation2 [shape = 'u8[65536]{0}', space=vmem, size = 0x10000, scoped, tag = 'input window, operand 1']
    #allocation3 [shape = 's32[2]{0}', space=sflag, size = 0x8, scoped, tag = 'scoped memory for tpu_custom_call.1']
    #allocation4 [shape = 's32[2]{0}', space=sflag, size = 0x8, scoped, tag = 'scoped memory for tpu_custom_call.1']
    #allocation5 [shape = 'u8[65536]{0}', space=vmem, size = 0x10000, scoped, tag = 'output window, operand 0']
    %13 = vsyncpa [#allocation3], 0
    %s14 = scalar_lea.sflag [#allocation3], 1
    %15 = vsyncpa %s14, 0
    %16 = vsyncpa [#allocation4], 0
    %s17 = scalar_lea.sflag [#allocation4], 1
    %18 = vsyncpa %s17, 0
    loop: start=0, step=1, limit=6
    $region2: #{tpu_custom_call.1} parent=1 // loop_pre_header
      _
    $region3: #{tpu_custom_call.1} parent=1 // loop_header
      %s20 = sphi 0, %s24
      %p21 = scmp.ge.s32.totalorder %s20, 6
      %s27 = sphi 0, %s39
      %s28 = sphi 0, %s35
      %s29 = sphi 0, %s27
      %s30 = sphi 0, %s28
      %s31 = sphi 0, %s29
      %s32 = sphi 0, %s30
      %s44 = sphi 0, %s46
      %s47 = sphi 0, %s44
      %s48 = sphi 0, %s47
      %s64 = sphi 0, %s48
      %s72 = sphi 0, %s74
      %s75 = sphi 0, %s72
      %s76 = sphi 0, %s75
      %s92 = sphi 0, %s76
      %s96 = sphi 0, %s96
      %s98 = sphi 0, %s96
      %s99 = sphi 0, %s98
      %s113 = sphi 0, %s99
      %s117 = sphi 0, %s117
      %s119 = sphi 0, %s117
      %s120 = sphi 0, %s119
      %s134 = sphi 0, %s120
      %s138 = sphi 0, %s138
      %s140 = sphi 0, %s138
      %s141 = sphi 0, %s140
      %s155 = sphi 0, %s141
      %s159 = sphi 0, %s159
      %s161 = sphi 0, %s159
      %s162 = sphi 0, %s161
      %s176 = sphi 0, %s162
      %s180 = sphi 0, %s180
      %s182 = sphi 0, %s180
      %s183 = sphi 0, %s182
      %s197 = sphi 0, %s183
      %s201 = sphi 0, %s201
      %s203 = sphi 0, %s201
      %s204 = sphi 0, %s203
      %s218 = sphi 0, %s204
      %s226 = sphi 0, %s228
      %s229 = sphi 0, %s226
      %s230 = sphi 0, %s229
      %s246 = sphi 0, %s230
    $region4: #{tpu_custom_call.1} parent=1 // loop_header_branch
      %23 = sbr.rel (%p21) target = $region8
    $region5: #{tpu_custom_call.1} parent=1 // loop_body
      %s25 = ssub.s32 %s20, 1
      %s26 = ssub.s32 %s20, 2
      %s33 = sadd.s32 1, %s28
      %p34 = scmp.ge.s32.totalorder %s33, 2
      %s35 = scalar_select %p34, 0, %s33
      %s36 = sadd.s32 1, %s27
      %s37 = scalar_select %p34, %s36, %s27
      %p38 = scmp.ge.s32.totalorder %s37, 2
      %s39 = scalar_select %p38, 0, %s37
      %s40 = ssub.s32 %s27, %s39
      %s41 = ssub.s32 %s28, %s35
      %s42 = sor.u32 %s40, %s41
      %p43 = scmp.eq.s32.totalorder %s42, 0
      %s45 = sadd.s32 %s44, 1
      %s46 = scalar_select %p43, %s44, %s45
      %p49 = pneg %p43
      %p50 = scmp.eq.s32.totalorder %s20, 3
      %p51 = por %p49, %p50
      %p52 = scmp.ne.s32.totalorder %s44, %s47
      %p53 = scmp.eq.s32.totalorder %s20, 0
      %p54 = por %p52, %p53
      %p55 = scmp.ne.s32.totalorder %s44, %s47
      %p56 = scmp.eq.s32.totalorder %s25, 3
      %p57 = por %p55, %p56
      %p58 = scmp.ne.s32.totalorder %s47, %s48
      %p59 = scmp.eq.s32.totalorder %s25, 0
      %p60 = por %p58, %p59
      %p61 = scmp.ne.s32.totalorder %s47, %s48
      %p62 = scmp.eq.s32.totalorder %s26, 3
      %p63 = por %p61, %p62
      %p65 = scmp.ne.s32.totalorder %s48, %s64
      %p66 = scmp.eq.s32.totalorder %s26, 0
      %p67 = por %p65, %p66
      %s68 = ssub.s32 %s27, %s39
      %s69 = ssub.s32 %s28, %s35
      %s70 = sor.u32 %s68, %s69
      %p71 = scmp.eq.s32.totalorder %s70, 0
      %s73 = sadd.s32 %s72, 1
      %s74 = scalar_select %p71, %s72, %s73
      %p77 = pneg %p71
      %p78 = scmp.eq.s32.totalorder %s20, 3
      %p79 = por %p77, %p78
      %p80 = scmp.ne.s32.totalorder %s72, %s75
      %p81 = scmp.eq.s32.totalorder %s20, 0
      %p82 = por %p80, %p81
      %p83 = scmp.ne.s32.totalorder %s72, %s75
      %p84 = scmp.eq.s32.totalorder %s25, 3
      %p85 = por %p83, %p84
      %p86 = scmp.ne.s32.totalorder %s75, %s76
      %p87 = scmp.eq.s32.totalorder %s25, 0
      %p88 = por %p86, %p87
      %p89 = scmp.ne.s32.totalorder %s75, %s76
      %p90 = scmp.eq.s32.totalorder %s26, 3
      %p91 = por %p89, %p90
      %p93 = scmp.ne.s32.totalorder %s76, %s92
      %p94 = scmp.eq.s32.totalorder %s26, 0
      %p95 = por %p93, %p94
      %s97 = sadd.s32 %s96, 1
      %p100 = scmp.eq.s32.totalorder %s20, 3
      %p101 = scmp.ne.s32.totalorder %s96, %s98
      %p102 = scmp.eq.s32.totalorder %s20, 0
      %p103 = por %p101, %p102
      %p104 = scmp.ne.s32.totalorder %s96, %s98
      %p105 = scmp.eq.s32.totalorder %s25, 3
      %p106 = por %p104, %p105
      %p107 = scmp.ne.s32.totalorder %s98, %s99
      %p108 = scmp.eq.s32.totalorder %s25, 0
      %p109 = por %p107, %p108
      %p110 = scmp.ne.s32.totalorder %s98, %s99
      %p111 = scmp.eq.s32.totalorder %s26, 3
      %p112 = por %p110, %p111
      %p114 = scmp.ne.s32.totalorder %s99, %s113
      %p115 = scmp.eq.s32.totalorder %s26, 0
      %p116 = por %p114, %p115
      %s118 = sadd.s32 %s117, 1
      %p121 = scmp.eq.s32.totalorder %s20, 3
      %p122 = scmp.ne.s32.totalorder %s117, %s119
      %p123 = scmp.eq.s32.totalorder %s20, 0
      %p124 = por %p122, %p123
      %p125 = scmp.ne.s32.totalorder %s117, %s119
      %p126 = scmp.eq.s32.totalorder %s25, 3
      %p127 = por %p125, %p126
      %p128 = scmp.ne.s32.totalorder %s119, %s120
      %p129 = scmp.eq.s32.totalorder %s25, 0
      %p130 = por %p128, %p129
      %p131 = scmp.ne.s32.totalorder %s119, %s120
      %p132 = scmp.eq.s32.totalorder %s26, 3
      %p133 = por %p131, %p132
      %p135 = scmp.ne.s32.totalorder %s120, %s134
      %p136 = scmp.eq.s32.totalorder %s26, 0
      %p137 = por %p135, %p136
      %s139 = sadd.s32 %s138, 1
      %p142 = scmp.eq.s32.totalorder %s20, 3
      %p143 = scmp.ne.s32.totalorder %s138, %s140
      %p144 = scmp.eq.s32.totalorder %s20, 0
      %p145 = por %p143, %p144
      %p146 = scmp.ne.s32.totalorder %s138, %s140
      %p147 = scmp.eq.s32.totalorder %s25, 3
      %p148 = por %p146, %p147
      %p149 = scmp.ne.s32.totalorder %s140, %s141
      %p150 = scmp.eq.s32.totalorder %s25, 0
      %p151 = por %p149, %p150
      %p152 = scmp.ne.s32.totalorder %s140, %s141
      %p153 = scmp.eq.s32.totalorder %s26, 3
      %p154 = por %p152, %p153
      %p156 = scmp.ne.s32.totalorder %s141, %s155
      %p157 = scmp.eq.s32.totalorder %s26, 0
      %p158 = por %p156, %p157
      %s160 = sadd.s32 %s159, 1
      %p163 = scmp.eq.s32.totalorder %s20, 3
      %p164 = scmp.ne.s32.totalorder %s159, %s161
      %p165 = scmp.eq.s32.totalorder %s20, 0
      %p166 = por %p164, %p165
      %p167 = scmp.ne.s32.totalorder %s159, %s161
      %p168 = scmp.eq.s32.totalorder %s25, 3
      %p169 = por %p167, %p168
      %p170 = scmp.ne.s32.totalorder %s161, %s162
      %p171 = scmp.eq.s32.totalorder %s25, 0
      %p172 = por %p170, %p171
      %p173 = scmp.ne.s32.totalorder %s161, %s162
      %p174 = scmp.eq.s32.totalorder %s26, 3
      %p175 = por %p173, %p174
      %p177 = scmp.ne.s32.totalorder %s162, %s176
      %p178 = scmp.eq.s32.totalorder %s26, 0
      %p179 = por %p177, %p178
      %s181 = sadd.s32 %s180, 1
      %p184 = scmp.eq.s32.totalorder %s20, 3
      %p185 = scmp.ne.s32.totalorder %s180, %s182
      %p186 = scmp.eq.s32.totalorder %s20, 0
      %p187 = por %p185, %p186
      %p188 = scmp.ne.s32.totalorder %s180, %s182
      %p189 = scmp.eq.s32.totalorder %s25, 3
      %p190 = por %p188, %p189
      %p191 = scmp.ne.s32.totalorder %s182, %s183
      %p192 = scmp.eq.s32.totalorder %s25, 0
      %p193 = por %p191, %p192
      %p194 = scmp.ne.s32.totalorder %s182, %s183
      %p195 = scmp.eq.s32.totalorder %s26, 3
      %p196 = por %p194, %p195
      %p198 = scmp.ne.s32.totalorder %s183, %s197
      %p199 = scmp.eq.s32.totalorder %s26, 0
      %p200 = por %p198, %p199
      %s202 = sadd.s32 %s201, 1
      %p205 = scmp.eq.s32.totalorder %s20, 3
      %p206 = scmp.ne.s32.totalorder %s201, %s203
      %p207 = scmp.eq.s32.totalorder %s20, 0
      %p208 = por %p206, %p207
      %p209 = scmp.ne.s32.totalorder %s201, %s203
      %p210 = scmp.eq.s32.totalorder %s25, 3
      %p211 = por %p209, %p210
      %p212 = scmp.ne.s32.totalorder %s203, %s204
      %p213 = scmp.eq.s32.totalorder %s25, 0
      %p214 = por %p212, %p213
      %p215 = scmp.ne.s32.totalorder %s203, %s204
      %p216 = scmp.eq.s32.totalorder %s26, 3
      %p217 = por %p215, %p216
      %p219 = scmp.ne.s32.totalorder %s204, %s218
      %p220 = scmp.eq.s32.totalorder %s26, 0
      %p221 = por %p219, %p220
      %s222 = ssub.s32 %s27, %s39
      %s223 = ssub.s32 %s28, %s35
      %s224 = sor.u32 %s222, %s223
      %p225 = scmp.eq.s32.totalorder %s224, 0
      %s227 = sadd.s32 %s226, 1
      %s228 = scalar_select %p225, %s226, %s227
      %p231 = pneg %p225
      %p232 = scmp.eq.s32.totalorder %s20, 3
      %p233 = por %p231, %p232
      %p234 = scmp.ne.s32.totalorder %s226, %s229
      %p235 = scmp.eq.s32.totalorder %s20, 0
      %p236 = por %p234, %p235
      %p237 = scmp.ne.s32.totalorder %s226, %s229
      %p238 = scmp.eq.s32.totalorder %s25, 3
      %p239 = por %p237, %p238
      %p240 = scmp.ne.s32.totalorder %s229, %s230
      %p241 = scmp.eq.s32.totalorder %s25, 0
      %p242 = por %p240, %p241
      %p243 = scmp.ne.s32.totalorder %s229, %s230
      %p244 = scmp.eq.s32.totalorder %s26, 3
      %p245 = por %p243, %p244
      %p247 = scmp.ne.s32.totalorder %s230, %s246
      %p248 = scmp.eq.s32.totalorder %s26, 0
      %p249 = por %p247, %p248
      %p250 = scmp.le.s32.totalorder 1, %s20
      %p251 = scmp.lt.s32.totalorder %s20, 5
      %p252 = pnand %p250, %p251
      %p253 = pneg %p252
      // Predicated region
      $region9: #{tpu_custom_call.1} parent=5 // pred_check
        _
      $region10: #{tpu_custom_call.1} parent=5 // pred_check_branch
        %255 = sbr.rel (%p252) target = $region12
      $region11: #{tpu_custom_call.1} parent=5 // pred_region
        %s256 = ssub.s32 %s20, 1
        // Predicated region
        $region13: #{tpu_custom_call.1} parent=11 // pred_check
          %p257 = pneg %p109
        $region14: #{tpu_custom_call.1} parent=11 // pred_check_branch
          %259 = sbr.rel (%p257) target = $region16
        $region15: #{tpu_custom_call.1} parent=11 // pred_region
          _
        $region16: #{tpu_custom_call.1} parent=11 // pred_fallthru
          _
        // Predicated region
        $region17: #{tpu_custom_call.1} parent=11 // pred_check
          %p260 = pneg %p130
        $region18: #{tpu_custom_call.1} parent=11 // pred_check_branch
          %262 = sbr.rel (%p260) target = $region20
        $region19: #{tpu_custom_call.1} parent=11 // pred_region
          _
        $region20: #{tpu_custom_call.1} parent=11 // pred_fallthru
          _
        // Predicated region
        $region21: #{tpu_custom_call.1} parent=11 // pred_check
          %p263 = pneg %p151
        $region22: #{tpu_custom_call.1} parent=11 // pred_check_branch
          %265 = sbr.rel (%p263) target = $region24
        $region23: #{tpu_custom_call.1} parent=11 // pred_region
          _
        $region24: #{tpu_custom_call.1} parent=11 // pred_fallthru
          _
        // Predicated region
        $region25: #{tpu_custom_call.1} parent=11 // pred_check
          %p266 = pneg %p172
        $region26: #{tpu_custom_call.1} parent=11 // pred_check_branch
          %268 = sbr.rel (%p266) target = $region28
        $region27: #{tpu_custom_call.1} parent=11 // pred_region
          _
        $region28: #{tpu_custom_call.1} parent=11 // pred_fallthru
          _
        // Predicated region
        $region29: #{tpu_custom_call.1} parent=11 // pred_check
          %p269 = pneg %p193
        $region30: #{tpu_custom_call.1} parent=11 // pred_check_branch
          %271 = sbr.rel (%p269) target = $region32
        $region31: #{tpu_custom_call.1} parent=11 // pred_region
          _
        $region32: #{tpu_custom_call.1} parent=11 // pred_fallthru
          _
        // Predicated region
        $region33: #{tpu_custom_call.1} parent=11 // pred_check
          %p272 = pneg %p214
        $region34: #{tpu_custom_call.1} parent=11 // pred_check_branch
          %274 = sbr.rel (%p272) target = $region36
        $region35: #{tpu_custom_call.1} parent=11 // pred_region
          _
        $region36: #{tpu_custom_call.1} parent=11 // pred_fallthru
          _
      $region12: #{tpu_custom_call.1} parent=5 // pred_fallthru
        _
      %p275 = scmp.lt.s32.totalorder %s20, 4
      // Predicated region
      $region37: #{tpu_custom_call.1} parent=5 // pred_check
        %p276 = pneg %p275
      $region38: #{tpu_custom_call.1} parent=5 // pred_check_branch
        %278 = sbr.rel (%p276) target = $region40
      $region39: #{tpu_custom_call.1} parent=5 // pred_region
        // Predicated region
        $region41: #{tpu_custom_call.1} parent=39 // pred_check
          %p279 = pneg %p54
        $region42: #{tpu_custom_call.1} parent=39 // pred_check_branch
          %281 = sbr.rel (%p279) target = $region44
        $region43: #{tpu_custom_call.1} parent=39 // pred_region
          %s282 = smul.u32 2, %s28
          %p283 = scmp.lt.s32.totalorder %s27, 1
          %s284 = scalar_select %p283, %s27, 1
          %p285 = scmp.lt.s32.totalorder %s282, 3
          %s286 = scalar_select %p285, %s282, 3
          %s287 = smul.addr %s284, 4
          %s288 = sadd.s32 %s286, %s287
          %s289 = smul.addr %s288, 4
          %s290 = scalar_lea.vmem %s0, %s289
          %s291 = smul.u32 2, %s28
        $region44: #{tpu_custom_call.1} parent=39 // pred_fallthru
          _
        // Predicated region
        $region45: #{tpu_custom_call.1} parent=39 // pred_check
          %p292 = pneg %p82
        $region46: #{tpu_custom_call.1} parent=39 // pred_check_branch
          %294 = sbr.rel (%p292) target = $region48
        $region47: #{tpu_custom_call.1} parent=39 // pred_region
          %s295 = sand.u32 %s72, 1
          %s296 = scalar_lea.sflag [#allocation3], %s295
          %s297 = sand.u32 %s72, 1
          %s298 = smul.addr %s297, 64
          %s299 = scalar_lea.vmem [#allocation2], %s298
          %s300 = smul.u32 2, %s28
          %302 = vsyncadd %s296, 0
          %s303 = smul.addr %s27, 16
          %s304 = sadd.s32 %s300, %s303
          %s305 = smul.addr %s304, 8
          %s306 = scalar_lea.hbm %s1, %s305
          %s307 = sshll.u32 %s306, 4
          %s308 = int_to_ptr.hbm [resolvable:$true] %s307
          %s309 = sshll.u32 %s299, 4
          %s310 = int_to_ptr.vmem [resolvable:$true] %s309
          %315 = dma.hbm_to_vmem [thread:$0]  %s308, 1024, %s310, %s296, 512, 256, 16
        $region48: #{tpu_custom_call.1} parent=39 // pred_fallthru
          _
      $region40: #{tpu_custom_call.1} parent=5 // pred_fallthru
        _
      %p316 = scmp.le.s32.totalorder 1, %s20
      %p317 = scmp.lt.s32.totalorder %s20, 5
      %p318 = pnand %p316, %p317
      %p319 = pneg %p318
      // Predicated region
      $region49: #{tpu_custom_call.1} parent=5 // pred_check
        _
      $region50: #{tpu_custom_call.1} parent=5 // pred_check_branch
        %321 = sbr.rel (%p318) target = $region52
      $region51: #{tpu_custom_call.1} parent=5 // pred_region
        %s322 = ssub.s32 %s20, 1
        %s323 = sand.u32 %s75, 1
        %s324 = scalar_lea.sflag [#allocation3], %s323
        %s325 = sand.u32 %s75, 1
        %s326 = smul.addr %s325, 64
        %s327 = scalar_lea.vmem [#allocation2], %s326
        // Predicated region
        $region53: #{tpu_custom_call.1} parent=51 // pred_check
          %p328 = pneg %p88
        $region54: #{tpu_custom_call.1} parent=51 // pred_check_branch
          %330 = sbr.rel (%p328) target = $region56
        $region55: #{tpu_custom_call.1} parent=51 // pred_region
          %332 = dma.done %s324, 1024
        $region56: #{tpu_custom_call.1} parent=51 // pred_fallthru
          _
        %s333 = smul.u32 2, %s30
        %p334 = scmp.lt.s32.totalorder %s29, 1
        %s335 = scalar_select %p334, %s29, 1
        %p336 = scmp.lt.s32.totalorder %s333, 3
        %s337 = scalar_select %p336, %s333, 3
        %s338 = smul.addr %s335, 4
        %s339 = sadd.s32 %s337, %s338
        %s340 = smul.addr %s339, 4
        %s341 = scalar_lea.vmem %s0, %s340
        %p342 = pneg %p60
        %p343 = pneg %p57
        %s344 = sand.u32 %s75, 1
        %s345 = scalar_lea.sflag [#allocation3], %s344
        %s346 = sand.u32 %s75, 1
        %s347 = smul.addr %s346, 64
        %s348 = scalar_lea.vmem [#allocation2], %s347
        %p349 = pneg %p88
        %p350 = pneg %p85
        %p351 = pneg %p109
        %p352 = pneg %p106
        %p353 = pneg %p130
        %p354 = pneg %p127
        %p355 = pneg %p151
        %p356 = pneg %p148
        %p357 = pneg %p172
        %p358 = pneg %p169
        %p359 = pneg %p193
        %p360 = pneg %p190
        %p361 = pneg %p214
        %p362 = pneg %p211
        %p363 = pneg %p242
        %p364 = pneg %p239
        %s365 = sand.u32 %s229, 1
        %s366 = scalar_lea.sflag [#allocation4], %s365
        %s367 = sand.u32 %s229, 1
        %s368 = smul.addr %s367, 64
        %s369 = scalar_lea.vmem [#allocation5], %s368
        %s370 = smul.u32 2, %s30
        %p371 = scmp.lt.s32.totalorder %s29, 1
        %s372 = scalar_select %p371, %s29, 1
        %p373 = scmp.lt.s32.totalorder %s370, 3
        %s374 = scalar_select %p373, %s370, 3
        %s375 = smul.addr %s372, 4
        %s376 = sadd.s32 %s374, %s375
        %s377 = smul.addr %s376, 4
        %s378 = scalar_lea.vmem %s0, %s377
        %s379 = smul.u32 2, %s30
        %s380 = smul.u32 2, %s30
        %s381 = smul.u32 2, %s30
        %v382 = vld [vmem:[%s2] sm:$0xff]
        %v383 = vld [vmem:[%s2 + $0x8] sm:$0xff]
        %v384 = vld [vmem:[%s2 + $0x10] sm:$0xff]
        %v385 = vld [vmem:[%s2 + $0x18] sm:$0xff]
        %v386 = vld [vmem:[%s378] ss:$4 sm:$0x3]
        %388 = vset.pattern.permute.xlu0 0
        %389 = vperm.xlu0 %388, %v382
        %v390 = vpop.permute.xlu0 %389
        %393 = vset.pattern.permute.xlu0 0
        %394 = vperm.xlu0 %393, %v383
        %v395 = vpop.permute.xlu0 %394
        %398 = vset.pattern.permute.xlu0 0
        %399 = vperm.xlu0 %398, %v384
        %v400 = vpop.permute.xlu0 %399
        %403 = vset.pattern.permute.xlu0 0
        %404 = vperm.xlu0 %403, %v385
        %v405 = vpop.permute.xlu0 %404
        %v408 = vperm.slane %v386, 0
        %v409 = vperm.slane %v386, 1
        %v412 = vmul.f32 %v390, %v408
        %v413 = vmul.f32 %v390, %v409
        %v414 = vmul.f32 %v395, %v408
        %v415 = vmul.f32 %v395, %v409
        %v416 = vmul.f32 %v400, %v408
        %v417 = vmul.f32 %v400, %v409
        %v418 = vmul.f32 %v405, %v408
        %v419 = vmul.f32 %v405, %v409
        %s420 = scalar_lea.vmem %s378, 1
        %v421 = vld [vmem:[%s420] ss:$4 sm:$0x3]
        %422 = vset.pattern.permute.xlu0 1
        %423 = vperm.xlu0 %422, %v382
        %v424 = vpop.permute.xlu0 %423
        %426 = vset.pattern.permute.xlu0 1
        %427 = vperm.xlu0 %426, %v383
        %v428 = vpop.permute.xlu0 %427
        %430 = vset.pattern.permute.xlu0 1
        %431 = vperm.xlu0 %430, %v384
        %v432 = vpop.permute.xlu0 %431
        %434 = vset.pattern.permute.xlu0 1
        %435 = vperm.xlu0 %434, %v385
        %v436 = vpop.permute.xlu0 %435
        %v439 = vperm.slane %v421, 0
        %v440 = vperm.slane %v421, 1
        %v443 = vmul.f32 %v424, %v439
        %v444 = vmul.f32 %v424, %v440
        %v445 = vmul.f32 %v428, %v439
        %v446 = vmul.f32 %v428, %v440
        %v447 = vmul.f32 %v432, %v439
        %v448 = vmul.f32 %v432, %v440
        %v449 = vmul.f32 %v436, %v439
        %v450 = vmul.f32 %v436, %v440
        %v451 = vadd.f32 %v412, %v443
        %v452 = vadd.f32 %v413, %v444
        %v453 = vadd.f32 %v414, %v445
        %v454 = vadd.f32 %v415, %v446
        %v455 = vadd.f32 %v416, %v447
        %v456 = vadd.f32 %v417, %v448
        %v457 = vadd.f32 %v418, %v449
        %v458 = vadd.f32 %v419, %v450
        %s459 = scalar_lea.vmem %s378, 2
        %v460 = vld [vmem:[%s459] ss:$4 sm:$0x3]
        %461 = vset.pattern.permute.xlu0 2
        %462 = vperm.xlu0 %461, %v382
        %v463 = vpop.permute.xlu0 %462
        %465 = vset.pattern.permute.xlu0 2
        %466 = vperm.xlu0 %465, %v383
        %v467 = vpop.permute.xlu0 %466
        %469 = vset.pattern.permute.xlu0 2
        %470 = vperm.xlu0 %469, %v384
        %v471 = vpop.permute.xlu0 %470
        %473 = vset.pattern.permute.xlu0 2
        %474 = vperm.xlu0 %473, %v385
        %v475 = vpop.permute.xlu0 %474
        %v478 = vperm.slane %v460, 0
        %v479 = vperm.slane %v460, 1
        %v482 = vmul.f32 %v463, %v478
        %v483 = vmul.f32 %v463, %v479
        %v484 = vmul.f32 %v467, %v478
        %v485 = vmul.f32 %v467, %v479
        %v486 = vmul.f32 %v471, %v478
        %v487 = vmul.f32 %v471, %v479
        %v488 = vmul.f32 %v475, %v478
        %v489 = vmul.f32 %v475, %v479
        %v490 = vadd.f32 %v451, %v482
        %v491 = vadd.f32 %v452, %v483
        %v492 = vadd.f32 %v453, %v484
        %v493 = vadd.f32 %v454, %v485
        %v494 = vadd.f32 %v455, %v486
        %v495 = vadd.f32 %v456, %v487
        %v496 = vadd.f32 %v457, %v488
        %v497 = vadd.f32 %v458, %v489
        %s498 = scalar_lea.vmem %s378, 3
        %v499 = vld [vmem:[%s498] ss:$4 sm:$0x3]
        %500 = vset.pattern.permute.xlu0 3
        %501 = vperm.xlu0 %500, %v382
        %v502 = vpop.permute.xlu0 %501
        %504 = vset.pattern.permute.xlu0 3
        %505 = vperm.xlu0 %504, %v383
        %v506 = vpop.permute.xlu0 %505
        %508 = vset.pattern.permute.xlu0 3
        %509 = vperm.xlu0 %508, %v384
        %v510 = vpop.permute.xlu0 %509
        %512 = vset.pattern.permute.xlu0 3
        %513 = vperm.xlu0 %512, %v385
        %v514 = vpop.permute.xlu0 %513
        %v517 = vperm.slane %v499, 0
        %v518 = vperm.slane %v499, 1
        %v521 = vmul.f32 %v502, %v517
        %v522 = vmul.f32 %v502, %v518
        %v523 = vmul.f32 %v506, %v517
        %v524 = vmul.f32 %v506, %v518
        %v525 = vmul.f32 %v510, %v517
        %v526 = vmul.f32 %v510, %v518
        %v527 = vmul.f32 %v514, %v517
        %v528 = vmul.f32 %v514, %v518
        %v529 = vadd.f32 %v490, %v521
        %v530 = vadd.f32 %v491, %v522
        %v531 = vadd.f32 %v492, %v523
        %v532 = vadd.f32 %v493, %v524
        %v533 = vadd.f32 %v494, %v525
        %v534 = vadd.f32 %v495, %v526
        %v535 = vadd.f32 %v496, %v527
        %v536 = vadd.f32 %v497, %v528
        %v537 = vld [vmem:[%s3] sm:$0xff]
        %v538 = vld [vmem:[%s3 + $0x8] sm:$0xff]
        %v539 = vld [vmem:[%s3 + $0x10] sm:$0xff]
        %v540 = vld [vmem:[%s3 + $0x18] sm:$0xff]
        %542 = vset.pattern.permute.xlu0 0
        %543 = vperm.xlu0 %542, %v537
        %v544 = vpop.permute.xlu0 %543
        %547 = vset.pattern.permute.xlu0 0
        %548 = vperm.xlu0 %547, %v538
        %v549 = vpop.permute.xlu0 %548
        %552 = vset.pattern.permute.xlu0 0
        %553 = vperm.xlu0 %552, %v539
        %v554 = vpop.permute.xlu0 %553
        %557 = vset.pattern.permute.xlu0 0
        %558 = vperm.xlu0 %557, %v540
        %v559 = vpop.permute.xlu0 %558
        %v561 = vadd.f32 %v529, %v544
        %v562 = vadd.f32 %v530, %v544
        %v563 = vadd.f32 %v531, %v549
        %v564 = vadd.f32 %v532, %v549
        %v565 = vadd.f32 %v533, %v554
        %v566 = vadd.f32 %v534, %v554
        %v567 = vadd.f32 %v535, %v559
        %v568 = vadd.f32 %v536, %v559
        %v569 = vmax.f32 %v561, 0.0
        %v570 = vmax.f32 %v562, 0.0
        %v571 = vmax.f32 %v563, 0.0
        %v572 = vmax.f32 %v564, 0.0
        %v573 = vmax.f32 %v565, 0.0
        %v574 = vmax.f32 %v566, 0.0
        %v575 = vmax.f32 %v567, 0.0
        %v576 = vmax.f32 %v568, 0.0
        %v577 = vld [vmem:[%s4] sm:$0xff]
        %v578 = vld [vmem:[%s4 + $0x8] sm:$0xff]
        %v579 = vld [vmem:[%s4 + $0x10] sm:$0xff]
        %v580 = vld [vmem:[%s4 + $0x18] sm:$0xff]
        %v581 = vld [vmem:[%s5] sm:$0xff]
        %v582 = vld [vmem:[%s5 + $0x8] sm:$0xff]
        %v583 = vld [vmem:[%s5 + $0x10] sm:$0xff]
        %v584 = vld [vmem:[%s5 + $0x18] sm:$0xff]
        %586 = vset.pattern.permute.xlu0 0
        %587 = vperm.xlu0 %586, %v581
        %v588 = vpop.permute.xlu0 %587
        %591 = vset.pattern.permute.xlu0 0
        %592 = vperm.xlu0 %591, %v582
        %v593 = vpop.permute.xlu0 %592
        %596 = vset.pattern.permute.xlu0 0
        %597 = vperm.xlu0 %596, %v583
        %v598 = vpop.permute.xlu0 %597
        %601 = vset.pattern.permute.xlu0 0
        %602 = vperm.xlu0 %601, %v584
        %v603 = vpop.permute.xlu0 %602
        %vm605 = vcmask 261120
        %v607 = vsel %vm605, %v577, 0
        %v610 = vsel %vm605, %v578, 0
        %v613 = vsel %vm605, %v579, 0
        %v616 = vsel %vm605, %v580, 0
        %618 = vmatpush.msra.mxu0 0.0
        %619 = vmatpush.msra.mxu0 0.0
        %620 = vmatpush.msra.mxu0 0.0
        %621 = vmatpush.msra.mxu0 0.0
        %622 = vmatpush.msra.mxu0 0.0
        %623 = vmatpush.msra.mxu0 0.0
        %624 = vmatpush.msra.mxu0 0.0
        %625 = vmatpush.msra.mxu0 0.0
        %626 = vmatpush.msra.mxu0 0.0
        %627 = vmatpush.msra.mxu0 0.0
        %628 = vmatpush.msra.mxu0 0.0
        %629 = vmatpush.msra.mxu0 0.0
        %630 = vmatpush.msra.mxu0 %v575
        %631 = vmatpush.msra.mxu0 %v573
        %632 = vmatpush.msra.mxu0 %v571
        %633 = vmatpush.msra.mxu0 %v569
        %634 = vmatmul.f32.gmra.mxu0 %v607
        %v635 = vpop.f32.mrf.mxu0
        %v636 = vadd.f32 %v588, %v635
        %637 = vmatmul.f32.gmra.mxu0 %v610
        %v638 = vpop.f32.mrf.mxu0
        %v639 = vadd.f32 %v593, %v638
        %640 = vmatmul.f32.gmra.mxu0 %v613
        %v641 = vpop.f32.mrf.mxu0
        %v642 = vadd.f32 %v598, %v641
        %643 = vmatmul.f32.gmra.mxu0 %v616
        %v644 = vpop.f32.mrf.mxu0
        %v645 = vadd.f32 %v603, %v644
        %646 = vdwg.mxu0
        %647 = vmatpush.msra.mxu0 0.0
        %648 = vmatpush.msra.mxu0 0.0
        %649 = vmatpush.msra.mxu0 0.0
        %650 = vmatpush.msra.mxu0 0.0
        %651 = vmatpush.msra.mxu0 0.0
        %652 = vmatpush.msra.mxu0 0.0
        %653 = vmatpush.msra.mxu0 0.0
        %654 = vmatpush.msra.mxu0 0.0
        %655 = vmatpush.msra.mxu0 0.0
        %656 = vmatpush.msra.mxu0 0.0
        %657 = vmatpush.msra.mxu0 0.0
        %658 = vmatpush.msra.mxu0 0.0
        %659 = vmatpush.msra.mxu0 %v576
        %660 = vmatpush.msra.mxu0 %v574
        %661 = vmatpush.msra.mxu0 %v572
        %662 = vmatpush.msra.mxu0 %v570
        %663 = vmatmul.f32.gmra.mxu0 %v607
        %v664 = vpop.f32.mrf.mxu0
        %v665 = vadd.f32 %v588, %v664
        %666 = vmatmul.f32.gmra.mxu0 %v610
        %v667 = vpop.f32.mrf.mxu0
        %v668 = vadd.f32 %v593, %v667
        %669 = vmatmul.f32.gmra.mxu0 %v613
        %v670 = vpop.f32.mrf.mxu0
        %v671 = vadd.f32 %v598, %v670
        %672 = vmatmul.f32.gmra.mxu0 %v616
        %v673 = vpop.f32.mrf.mxu0
        %v674 = vadd.f32 %v603, %v673
        %675 = vdwg.mxu0
        %v676 = vmax.f32 %v636, 0.0
        %v677 = vmax.f32 %v665, 0.0
        %v678 = vmax.f32 %v639, 0.0
        %v679 = vmax.f32 %v668, 0.0
        %v680 = vmax.f32 %v642, 0.0
        %v681 = vmax.f32 %v671, 0.0
        %v682 = vmax.f32 %v645, 0.0
        %v683 = vmax.f32 %v674, 0.0
        %v684 = vld [vmem:[%s6] sm:$0xff]
        %v685 = vld [vmem:[%s6 + $0x8] sm:$0xff]
        %v686 = vld [vmem:[%s6 + $0x10] sm:$0xff]
        %v687 = vld [vmem:[%s6 + $0x18] sm:$0xff]
        %v688 = vld [vmem:[%s7] sm:$0xff]
        %v689 = vld [vmem:[%s7 + $0x8] sm:$0xff]
        %v690 = vld [vmem:[%s7 + $0x10] sm:$0xff]
        %v691 = vld [vmem:[%s7 + $0x18] sm:$0xff]
        %693 = vset.pattern.permute.xlu0 0
        %694 = vperm.xlu0 %693, %v688
        %v695 = vpop.permute.xlu0 %694
        %698 = vset.pattern.permute.xlu0 0
        %699 = vperm.xlu0 %698, %v689
        %v700 = vpop.permute.xlu0 %699
        %703 = vset.pattern.permute.xlu0 0
        %704 = vperm.xlu0 %703, %v690
        %v705 = vpop.permute.xlu0 %704
        %708 = vset.pattern.permute.xlu0 0
        %709 = vperm.xlu0 %708, %v691
        %v710 = vpop.permute.xlu0 %709
        %v713 = vsel %vm605, %v684, 0
        %v716 = vsel %vm605, %v685, 0
        %v719 = vsel %vm605, %v686, 0
        %v722 = vsel %vm605, %v687, 0
        %724 = vmatpush.msra.mxu0 0.0
        %725 = vmatpush.msra.mxu0 0.0
        %726 = vmatpush.msra.mxu0 0.0
        %727 = vmatpush.msra.mxu0 0.0
        %728 = vmatpush.msra.mxu0 0.0
        %729 = vmatpush.msra.mxu0 0.0
        %730 = vmatpush.msra.mxu0 0.0
        %731 = vmatpush.msra.mxu0 0.0
        %732 = vmatpush.msra.mxu0 0.0
        %733 = vmatpush.msra.mxu0 0.0
        %734 = vmatpush.msra.mxu0 0.0
        %735 = vmatpush.msra.mxu0 0.0
        %736 = vmatpush.msra.mxu0 %v682
        %737 = vmatpush.msra.mxu0 %v680
        %738 = vmatpush.msra.mxu0 %v678
        %739 = vmatpush.msra.mxu0 %v676
        %740 = vmatmul.f32.gmra.mxu0 %v713
        %v741 = vpop.f32.mrf.mxu0
        %v742 = vadd.f32 %v695, %v741
        %743 = vmatmul.f32.gmra.mxu0 %v716
        %v744 = vpop.f32.mrf.mxu0
        %v745 = vadd.f32 %v700, %v744
        %746 = vmatmul.f32.gmra.mxu0 %v719
        %v747 = vpop.f32.mrf.mxu0
        %v748 = vadd.f32 %v705, %v747
        %749 = vmatmul.f32.gmra.mxu0 %v722
        %v750 = vpop.f32.mrf.mxu0
        %v751 = vadd.f32 %v710, %v750
        %752 = vdwg.mxu0
        %753 = vmatpush.msra.mxu0 0.0
        %754 = vmatpush.msra.mxu0 0.0
        %755 = vmatpush.msra.mxu0 0.0
        %756 = vmatpush.msra.mxu0 0.0
        %757 = vmatpush.msra.mxu0 0.0
        %758 = vmatpush.msra.mxu0 0.0
        %759 = vmatpush.msra.mxu0 0.0
        %760 = vmatpush.msra.mxu0 0.0
        %761 = vmatpush.msra.mxu0 0.0
        %762 = vmatpush.msra.mxu0 0.0
        %763 = vmatpush.msra.mxu0 0.0
        %764 = vmatpush.msra.mxu0 0.0
        %765 = vmatpush.msra.mxu0 %v683
        %766 = vmatpush.msra.mxu0 %v681
        %767 = vmatpush.msra.mxu0 %v679
        %768 = vmatpush.msra.mxu0 %v677
        %769 = vmatmul.f32.gmra.mxu0 %v713
        %v770 = vpop.f32.mrf.mxu0
        %v771 = vadd.f32 %v695, %v770
        %772 = vmatmul.f32.gmra.mxu0 %v716
        %v773 = vpop.f32.mrf.mxu0
        %v774 = vadd.f32 %v700, %v773
        %775 = vmatmul.f32.gmra.mxu0 %v719
        %v776 = vpop.f32.mrf.mxu0
        %v777 = vadd.f32 %v705, %v776
        %778 = vmatmul.f32.gmra.mxu0 %v722
        %v779 = vpop.f32.mrf.mxu0
        %v780 = vadd.f32 %v710, %v779
        %781 = vdwg.mxu0
        %v782 = vld [vmem:[%s327] sm:$0xff]
        %v783 = vld [vmem:[%s327 + $0x8] sm:$0xff]
        %v784 = vld [vmem:[%s327 + $0x10] sm:$0xff]
        %v785 = vld [vmem:[%s327 + $0x18] sm:$0xff]
        %v786 = vld [vmem:[%s327 + $0x20] sm:$0xff]
        %v787 = vld [vmem:[%s327 + $0x28] sm:$0xff]
        %v788 = vld [vmem:[%s327 + $0x30] sm:$0xff]
        %v789 = vld [vmem:[%s327 + $0x38] sm:$0xff]
        %v790 = vxor.u32 %v742, 2147483648
        %v791 = vxor.u32 %v771, 2147483648
        %v792 = vxor.u32 %v745, 2147483648
        %v793 = vxor.u32 %v774, 2147483648
        %v794 = vxor.u32 %v748, 2147483648
        %v795 = vxor.u32 %v777, 2147483648
        %v796 = vxor.u32 %v751, 2147483648
        %v797 = vxor.u32 %v780, 2147483648
        %v798 = vmul.f32 %v790, 1.442695
        %v799 = vpow.pop %v798
        %v800 = vmul.f32 %v791, 1.442695
        %v801 = vpow.pop %v800
        %v802 = vmul.f32 %v792, 1.442695
        %v803 = vpow.pop %v802
        %v804 = vmul.f32 %v793, 1.442695
        %v805 = vpow.pop %v804
        %v806 = vmul.f32 %v794, 1.442695
        %v807 = vpow.pop %v806
        %v808 = vmul.f32 %v795, 1.442695
        %v809 = vpow.pop %v808
        %v810 = vmul.f32 %v796, 1.442695
        %v811 = vpow.pop %v810
        %v812 = vmul.f32 %v797, 1.442695
        %v813 = vpow.pop %v812
        %v814 = vadd.f32 %v799, 1.0
        %v815 = vadd.f32 %v801, 1.0
        %v816 = vadd.f32 %v803, 1.0
        %v817 = vadd.f32 %v805, 1.0
        %v818 = vadd.f32 %v807, 1.0
        %v819 = vadd.f32 %v809, 1.0
        %v820 = vadd.f32 %v811, 1.0
        %v821 = vadd.f32 %v813, 1.0
        %v822 = vrcp.pop %v814
        %v823 = vmul.f32 %v814, %v822
        %v824 = vsub.f32 1.0, %v823
        %v825 = vmul.f32 %v822, %v824
        %v826 = vadd.f32 %v822, %v825
        %vm827 = vweird.f32 %v814
        %vm828 = vweird.f32 %v822
        %vm829 = vmor %vm827, %vm828
        %v830 = vsel %vm829, %v822, %v826
        %v831 = vand.u32 2147483647, %v814
        %vm832 = vcmp.eq.f32.partialorder %v831, 8.507059e+37
        %v833 = vand.u32 %v814, 2147483648
        %v834 = vor.u32 1.1754944e-38, %v833
        %v835 = vsel %vm832, %v834, %v830
        %v836 = vmul.f32 1.0, %v835
        %v837 = vrcp.pop %v815
        %v838 = vmul.f32 %v815, %v837
        %v839 = vsub.f32 1.0, %v838
        %v840 = vmul.f32 %v837, %v839
        %v841 = vadd.f32 %v837, %v840
        %vm842 = vweird.f32 %v815
        %vm843 = vweird.f32 %v837
        %vm844 = vmor %vm842, %vm843
        %v845 = vsel %vm844, %v837, %v841
        %v846 = vand.u32 2147483647, %v815
        %vm847 = vcmp.eq.f32.partialorder %v846, 8.507059e+37
        %v848 = vand.u32 %v815, 2147483648
        %v849 = vor.u32 1.1754944e-38, %v848
        %v850 = vsel %vm847, %v849, %v845
        %v851 = vmul.f32 1.0, %v850
        %v852 = vrcp.pop %v816
        %v853 = vmul.f32 %v816, %v852
        %v854 = vsub.f32 1.0, %v853
        %v855 = vmul.f32 %v852, %v854
        %v856 = vadd.f32 %v852, %v855
        %vm857 = vweird.f32 %v816
        %vm858 = vweird.f32 %v852
        %vm859 = vmor %vm857, %vm858
        %v860 = vsel %vm859, %v852, %v856
        %v861 = vand.u32 2147483647, %v816
        %vm862 = vcmp.eq.f32.partialorder %v861, 8.507059e+37
        %v863 = vand.u32 %v816, 2147483648
        %v864 = vor.u32 1.1754944e-38, %v863
        %v865 = vsel %vm862, %v864, %v860
        %v866 = vmul.f32 1.0, %v865
        %v867 = vrcp.pop %v817
        %v868 = vmul.f32 %v817, %v867
        %v869 = vsub.f32 1.0, %v868
        %v870 = vmul.f32 %v867, %v869
        %v871 = vadd.f32 %v867, %v870
        %vm872 = vweird.f32 %v817
        %vm873 = vweird.f32 %v867
        %vm874 = vmor %vm872, %vm873
        %v875 = vsel %vm874, %v867, %v871
        %v876 = vand.u32 2147483647, %v817
        %vm877 = vcmp.eq.f32.partialorder %v876, 8.507059e+37
        %v878 = vand.u32 %v817, 2147483648
        %v879 = vor.u32 1.1754944e-38, %v878
        %v880 = vsel %vm877, %v879, %v875
        %v881 = vmul.f32 1.0, %v880
        %v882 = vrcp.pop %v818
        %v883 = vmul.f32 %v818, %v882
        %v884 = vsub.f32 1.0, %v883
        %v885 = vmul.f32 %v882, %v884
        %v886 = vadd.f32 %v882, %v885
        %vm887 = vweird.f32 %v818
        %vm888 = vweird.f32 %v882
        %vm889 = vmor %vm887, %vm888
        %v890 = vsel %vm889, %v882, %v886
        %v891 = vand.u32 2147483647, %v818
        %vm892 = vcmp.eq.f32.partialorder %v891, 8.507059e+37
        %v893 = vand.u32 %v818, 2147483648
        %v894 = vor.u32 1.1754944e-38, %v893
        %v895 = vsel %vm892, %v894, %v890
        %v896 = vmul.f32 1.0, %v895
        %v897 = vrcp.pop %v819
        %v898 = vmul.f32 %v819, %v897
        %v899 = vsub.f32 1.0, %v898
        %v900 = vmul.f32 %v897, %v899
        %v901 = vadd.f32 %v897, %v900
        %vm902 = vweird.f32 %v819
        %vm903 = vweird.f32 %v897
        %vm904 = vmor %vm902, %vm903
        %v905 = vsel %vm904, %v897, %v901
        %v906 = vand.u32 2147483647, %v819
        %vm907 = vcmp.eq.f32.partialorder %v906, 8.507059e+37
        %v908 = vand.u32 %v819, 2147483648
        %v909 = vor.u32 1.1754944e-38, %v908
        %v910 = vsel %vm907, %v909, %v905
        %v911 = vmul.f32 1.0, %v910
        %v912 = vrcp.pop %v820
        %v913 = vmul.f32 %v820, %v912
        %v914 = vsub.f32 1.0, %v913
        %v915 = vmul.f32 %v912, %v914
        %v916 = vadd.f32 %v912, %v915
        %vm917 = vweird.f32 %v820
        %vm918 = vweird.f32 %v912
        %vm919 = vmor %vm917, %vm918
        %v920 = vsel %vm919, %v912, %v916
        %v921 = vand.u32 2147483647, %v820
        %vm922 = vcmp.eq.f32.partialorder %v921, 8.507059e+37
        %v923 = vand.u32 %v820, 2147483648
        %v924 = vor.u32 1.1754944e-38, %v923
        %v925 = vsel %vm922, %v924, %v920
        %v926 = vmul.f32 1.0, %v925
        %v927 = vrcp.pop %v821
        %v928 = vmul.f32 %v821, %v927
        %v929 = vsub.f32 1.0, %v928
        %v930 = vmul.f32 %v927, %v929
        %v931 = vadd.f32 %v927, %v930
        %vm932 = vweird.f32 %v821
        %vm933 = vweird.f32 %v927
        %vm934 = vmor %vm932, %vm933
        %v935 = vsel %vm934, %v927, %v931
        %v936 = vand.u32 2147483647, %v821
        %vm937 = vcmp.eq.f32.partialorder %v936, 8.507059e+37
        %v938 = vand.u32 %v821, 2147483648
        %v939 = vor.u32 1.1754944e-38, %v938
        %v940 = vsel %vm937, %v939, %v935
        %v941 = vmul.f32 1.0, %v940
        %v942 = vmul.f32 %v782, %v836
        %v943 = vmul.f32 %v783, %v851
        %v944 = vmul.f32 %v784, %v866
        %v945 = vmul.f32 %v785, %v881
        %v946 = vmul.f32 %v786, %v896
        %v947 = vmul.f32 %v787, %v911
        %v948 = vmul.f32 %v788, %v926
        %v949 = vmul.f32 %v789, %v941
        %950 = vst [vmem:[%s369] sm:$0xff] %v942
        %951 = vst [vmem:[%s369 + $0x8] sm:$0xff] %v943
        %952 = vst [vmem:[%s369 + $0x10] sm:$0xff] %v944
        %953 = vst [vmem:[%s369 + $0x18] sm:$0xff] %v945
        %954 = vst [vmem:[%s369 + $0x20] sm:$0xff] %v946
        %955 = vst [vmem:[%s369 + $0x28] sm:$0xff] %v947
        %956 = vst [vmem:[%s369 + $0x30] sm:$0xff] %v948
        %957 = vst [vmem:[%s369 + $0x38] sm:$0xff] %v949
        %s958 = sand.u32 %s229, 1
        %s959 = scalar_lea.sflag [#allocation4], %s958
        %s960 = sand.u32 %s229, 1
        %s961 = smul.addr %s960, 64
        %s962 = scalar_lea.vmem [#allocation5], %s961
        // Predicated region
        $region57: #{tpu_custom_call.1} parent=51 // pred_check
          %p963 = pneg %p239
        $region58: #{tpu_custom_call.1} parent=51 // pred_check_branch
          %965 = sbr.rel (%p963) target = $region60
        $region59: #{tpu_custom_call.1} parent=51 // pred_region
          %s966 = smul.u32 2, %s30
          %968 = vsyncadd %s959, 0
          %s969 = smul.addr %s29, 16
          %s970 = sadd.s32 %s966, %s969
          %s971 = smul.addr %s970, 8
          %s972 = scalar_lea.hbm %s8, %s971
          %s973 = sshll.u32 %s962, 4
          %s974 = int_to_ptr.vmem [resolvable:$true] %s973
          %s975 = sshll.u32 %s972, 4
          %s976 = int_to_ptr.hbm [resolvable:$true] %s975
          %981 = dma.vmem_to_hbm [thread:$0]  %s974, 1024, %s976, %s959, 256, 512, 16
        $region60: #{tpu_custom_call.1} parent=51 // pred_fallthru
          _
      $region52: #{tpu_custom_call.1} parent=5 // pred_fallthru
        _
      %p982 = scmp.le.s32.totalorder 2, %s20
      // Predicated region
      $region61: #{tpu_custom_call.1} parent=5 // pred_check
        %p983 = pneg %p982
      $region62: #{tpu_custom_call.1} parent=5 // pred_check_branch
        %985 = sbr.rel (%p983) target = $region64
      $region63: #{tpu_custom_call.1} parent=5 // pred_region
        %s986 = ssub.s32 %s20, 2
        // Predicated region
        $region65: #{tpu_custom_call.1} parent=63 // pred_check
          %p987 = pneg %p245
        $region66: #{tpu_custom_call.1} parent=63 // pred_check_branch
          %989 = sbr.rel (%p987) target = $region68
        $region67: #{tpu_custom_call.1} parent=63 // pred_region
          %s990 = sand.u32 %s230, 1
          %s991 = scalar_lea.sflag [#allocation4], %s990
          %s992 = sand.u32 %s230, 1
          %s993 = smul.addr %s992, 64
          %s994 = scalar_lea.vmem [#allocation5], %s993
          %996 = dma.done %s991, 1024
        $region68: #{tpu_custom_call.1} parent=63 // pred_fallthru
          _
      $region64: #{tpu_custom_call.1} parent=5 // pred_fallthru
        _
    $region6: #{tpu_custom_call.1} parent=1 // loop_footer
      %s24 = sadd.s32 1, %s20
    $region7: #{tpu_custom_call.1} parent=1 // loop_footer_branch
      %19 = sbr.rel target = $region3
    $region8: #{tpu_custom_call.1} parent=1 // loop_exit
      _
    %997 = vsyncpa [#allocation3], 1
    %s998 = scalar_lea.sflag [#allocation3], 1
    %999 = vsyncpa %s998, 1
    %1000 = vsyncpa [#allocation4], 1
    %s1001 = scalar_lea.sflag [#allocation4], 1
    %1002 = vsyncpa %s1001, 1

</llo_original>
